<compile_context>
chip_gen: v5e
topology: v5e:2x2
jax: 0.10.0
libtpu: 0.0.40
codegen_flags: <defaults>
</compile_context>

<pallas_src>
import functools

import jax
import jax.numpy as jnp
from jax.experimental import pallas as pl
from jax.experimental.pallas import tpu as pltpu


def _round_up(n, m):
    return ((n + m - 1) // m) * m


def _cdiv(a, b):
    return -(-a // b)


def _mlp_kernel(*refs, num_layers):
    """Fused MLP on one batch tile; activations never leave VMEM/vregs.

    refs = (x_ref, w0_ref, b0_ref, w1_ref, b1_ref, ..., o_ref)
      x_ref : [TB, in_dim]        fp32  (feature dim unpadded)
      wi_ref: [in_i, out_pad_i]   bf16  (pre-transposed; hidden/out dims zero-padded to 128)
      bi_ref: [1, out_pad_i]      fp32  (zero-padded)
      o_ref : [TB, 1]             fp32  (only the single real output column)
    """
    x_ref = refs[0]
    o_ref = refs[-1]
    wb_refs = refs[1:-1]

    h = x_ref[...]  # fp32
    for i in range(num_layers):
        w = wb_refs[2 * i][...]        # bf16 [in_i, out_pad_i]
        b = wb_refs[2 * i + 1][...]    # fp32 [1, out_pad_i]
        # MXU: bf16 x bf16 -> fp32 accumulate.
        y = jnp.dot(h.astype(jnp.bfloat16), w, preferred_element_type=jnp.float32)
        y = y + b                      # fp32 elementwise (v5e-friendly)
        if i < num_layers - 1:
            y = jnp.maximum(y, 0.0)    # ReLU (Dropout = identity at eval)
        h = y
    # Final padded result is [TB, 128]; the real scalar output is column 0.
    # Store only that column -> HBM writeback is TB*4 bytes instead of TB*512.
    o_ref[...] = h[:, 0:1].astype(o_ref.dtype)


def init_dnn_params(key, input_dim, hidden_dims):
    """Deterministic init mimicking nn.Linear: W [out, in], b [out], fp32."""
    dims = [input_dim] + list(hidden_dims) + [1]
    params = []
    for i in range(len(dims) - 1):
        fan_in, fan_out = dims[i], dims[i + 1]
        key, kw, kb = jax.random.split(key, 3)
        bound = 1.0 / jnp.sqrt(fan_in)
        w = jax.random.uniform(kw, (fan_out, fan_in), jnp.float32, -bound, bound)
        b = jax.random.uniform(kb, (fan_out,), jnp.float32, -bound, bound)
        params.append((w, b))
    return params


def prepare_params(params, input_dim):
    """One-time (outside the forward pass): transpose W to [in, out], zero-pad
    ONLY the hidden/output widths to multiples of 128 (weights total ~KBs),
    keep the model input dim unpadded, cast weights to bf16, biases to fp32
    [1, out_pad].  Zero padding keeps the math exact (padded lanes stay 0
    through bias-add=+0 and ReLU)."""
    prepared = []
    prev_out_pad = input_dim  # layer 0 contracts over the true input dim
    for w, b in params:
        out_dim, in_dim = w.shape
        in_pad = prev_out_pad
        out_pad = _round_up(out_dim, 128)
        w_t = jnp.zeros((in_pad, out_pad), jnp.float32).at[:in_dim, :out_dim].set(w.T)
        b2d = jnp.zeros((1, out_pad), jnp.float32).at[0, :out_dim].set(b)
        prepared.append((w_t.astype(jnp.bfloat16), b2d))
        prev_out_pad = out_pad
    return prepared


def _pick_tiling(B, tb_target):
    """Choose (TB, n_tiles): TB a multiple of 8, close to tb_target, with
    batch-padding waste < 8 rows per tile.  Keep >= 2 grid steps for large B
    so v7x's two TensorCores both get work (no-op on v5e/v6e)."""
    n_tiles = _cdiv(B, tb_target)
    if B >= 1024:
        n_tiles = max(n_tiles, 2)
    tb = _round_up(_cdiv(B, n_tiles), 8)
    return tb, n_tiles


def dnn_forward(x, prepared_params, *, tb_target=1024):
    """x: [B, input_dim] fp32 -> [B, 1] fp32. Single fused pallas_call.

    tb_target: batch-tile target; sweep 512-2048.  <=2048 keeps the working
    set comfortably under v5e's 16 MiB scoped-VMEM default."""
    B, in_dim = x.shape
    num_layers = len(prepared_params)

    TB, n_tiles = _pick_tiling(B, tb_target)
    B_pad = TB * n_tiles
    if B_pad != B:
        # Pad only the batch dim (< 8 junk rows per tile); features stay unpadded.
        x = jnp.pad(x, ((0, B_pad - B), (0, 0)))

    in_specs = [pl.BlockSpec((TB, in_dim), lambda i: (i, 0))]
    flat_inputs = [x]
    for w_t, b2d in prepared_params:
        # Weights/biases: full-array VMEM residents (constant index_map).
        in_specs.append(pl.BlockSpec(w_t.shape, lambda i: (0, 0)))
        in_specs.append(pl.BlockSpec(b2d.shape, lambda i: (0, 0)))
        flat_inputs.extend([w_t, b2d])

    out = pl.pallas_call(
        functools.partial(_mlp_kernel, num_layers=num_layers),
        grid=(n_tiles,),
        in_specs=in_specs,
        out_specs=pl.BlockSpec((TB, 1), lambda i: (i, 0)),
        out_shape=jax.ShapeDtypeStruct((B_pad, 1), jnp.float32),
        compiler_params=pltpu.CompilerParams(
            dimension_semantics=("parallel",),
        ),
    )(*flat_inputs)

    return out[:B]


def _ref_bf16(x, params):
    """Plain-JAX mirror of the kernel numerics: bf16 matmul operands, fp32 acc."""
    h = x
    for i, (w, b) in enumerate(params):
        a = h.astype(jnp.bfloat16).astype(jnp.float32)
        wt = w.T.astype(jnp.bfloat16).astype(jnp.float32)
        h = jnp.dot(a, wt, preferred_element_type=jnp.float32) + b
        if i < len(params) - 1:
            h = jnp.maximum(h, 0.0)
    return h


def _ref_fp32(x, params):
    """Pure-fp32 math of the original nn.Module (eval mode)."""
    h = x
    for i, (w, b) in enumerate(params):
        h = h @ w.T + b
        if i < len(params) - 1:
            h = jnp.maximum(h, 0.0)
    return h


if __name__ == "__main__":
    input_dim = 32
    hidden_dims = (64, 32)
    dropout_rate = 0.1  # identity at inference

    key = jax.random.PRNGKey(0)
    kx1, kx2, kp = jax.random.split(key, 3)

    params = init_dnn_params(kp, input_dim, hidden_dims)
    prepared = prepare_params(params, input_dim)  # one-time transpose/pad/bf16 cast

    # --- small batch (single tile, TB = 8) ---
    batch = 8
    x = jax.random.normal(kx1, (batch, input_dim), jnp.float32)
    out = jax.block_until_ready(dnn_forward(x, prepared))
    assert out.shape == (batch, 1), out.shape
    assert jnp.allclose(out, _ref_bf16(x, params), atol=1e-3, rtol=1e-3), (
        jnp.max(jnp.abs(out - _ref_bf16(x, params))))
    assert jnp.allclose(out, _ref_fp32(x, params), atol=2e-2, rtol=2e-2)

    # --- larger batch: exercises multi-tile grid + residual batch padding ---
    batch2 = 1300
    x2 = jax.random.normal(kx2, (batch2, input_dim), jnp.float32)
    out2 = jax.block_until_ready(dnn_forward(x2, prepared))
    assert out2.shape == (batch2, 1), out2.shape
    assert jnp.allclose(out2, _ref_bf16(x2, params), atol=1e-3, rtol=1e-3), (
        jnp.max(jnp.abs(out2 - _ref_bf16(x2, params))))
    assert jnp.allclose(out2, _ref_fp32(x2, params), atol=2e-2, rtol=2e-2)

    print("KERNEL_OK")
</pallas_src>

<mosaic_0001>
module attributes {stable_mosaic.version = 11 : i64} {
  func.func @_mlp_kernel(%arg0: i32, %arg1: memref<8x32xf32, #tpu.memory_space<vmem>>, %arg2: memref<32x128xbf16, #tpu.memory_space<vmem>>, %arg3: memref<1x128xf32, #tpu.memory_space<vmem>>, %arg4: memref<128x128xbf16, #tpu.memory_space<vmem>>, %arg5: memref<1x128xf32, #tpu.memory_space<vmem>>, %arg6: memref<128x128xbf16, #tpu.memory_space<vmem>>, %arg7: memref<1x128xf32, #tpu.memory_space<vmem>>, %arg8: memref<8x1xf32, #tpu.memory_space<vmem>>) attributes {dimension_semantics = [#tpu.dimension_semantics<parallel>], iteration_bounds = array<i64: 1>, scalar_prefetch = 0 : i64, scratch_operands = 0 : i64, tpu.core_type = #tpu.core_type<tc>, window_params = [{transform_indices = @transform_0, window_bounds = array<i64: 8, 32>}, {pipeline_mode = #tpu.pipeline_mode<synchronous>, transform_indices = @transform_1, window_bounds = array<i64: 32, 128>}, {pipeline_mode = #tpu.pipeline_mode<synchronous>, transform_indices = @transform_2, window_bounds = array<i64: 1, 128>}, {pipeline_mode = #tpu.pipeline_mode<synchronous>, transform_indices = @transform_3, window_bounds = array<i64: 128, 128>}, {pipeline_mode = #tpu.pipeline_mode<synchronous>, transform_indices = @transform_4, window_bounds = array<i64: 1, 128>}, {pipeline_mode = #tpu.pipeline_mode<synchronous>, transform_indices = @transform_5, window_bounds = array<i64: 128, 128>}, {pipeline_mode = #tpu.pipeline_mode<synchronous>, transform_indices = @transform_6, window_bounds = array<i64: 1, 128>}, {transform_indices = @transform_7, window_bounds = array<i64: 8, 1>}]} {
    %c0 = arith.constant 0 : index
    %c0_0 = arith.constant 0 : index
    %0 = vector.load %arg1[%c0, %c0_0] : memref<8x32xf32, #tpu.memory_space<vmem>>, vector<8x32xf32>
    %c0_1 = arith.constant 0 : index
    %c0_2 = arith.constant 0 : index
    %1 = vector.load %arg2[%c0_1, %c0_2] : memref<32x128xbf16, #tpu.memory_space<vmem>>, vector<32x128xbf16>
    %c0_3 = arith.constant 0 : index
    %c0_4 = arith.constant 0 : index
    %2 = vector.load %arg3[%c0_3, %c0_4] : memref<1x128xf32, #tpu.memory_space<vmem>>, vector<1x128xf32>
    %3 = arith.truncf %0 : vector<8x32xf32> to vector<8x32xbf16>
    %cst = arith.constant dense<0.000000e+00> : vector<8x128xf32>
    %4 = tpu.matmul %3, %1, %cst {dimension_numbers = #tpu.dot_dimension_numbers<[1], [0], [0], [1], [0, 0, 1, 1], [], []>} : vector<8x32xbf16>, vector<32x128xbf16>, vector<8x128xf32> -> vector<8x128xf32>
    %5 = vector.broadcast %2 : vector<1x128xf32> to vector<8x128xf32>
    %6 = arith.addf %4, %5 : vector<8x128xf32>
    %cst_5 = arith.constant 0.000000e+00 : f32
    %7 = vector.broadcast %cst_5 : f32 to vector<8x128xf32>
    %8 = arith.maximumf %6, %7 : vector<8x128xf32>
    %c0_6 = arith.constant 0 : index
    %c0_7 = arith.constant 0 : index
    %9 = vector.load %arg4[%c0_6, %c0_7] : memref<128x128xbf16, #tpu.memory_space<vmem>>, vector<128x128xbf16>
    %c0_8 = arith.constant 0 : index
    %c0_9 = arith.constant 0 : index
    %10 = vector.load %arg5[%c0_8, %c0_9] : memref<1x128xf32, #tpu.memory_space<vmem>>, vector<1x128xf32>
    %11 = arith.truncf %8 : vector<8x128xf32> to vector<8x128xbf16>
    %cst_10 = arith.constant dense<0.000000e+00> : vector<8x128xf32>
    %12 = tpu.matmul %11, %9, %cst_10 {dimension_numbers = #tpu.dot_dimension_numbers<[1], [0], [0], [1], [0, 0, 1, 1], [], []>} : vector<8x128xbf16>, vector<128x128xbf16>, vector<8x128xf32> -> vector<8x128xf32>
    %13 = vector.broadcast %10 : vector<1x128xf32> to vector<8x128xf32>
    %14 = arith.addf %12, %13 : vector<8x128xf32>
    %cst_11 = arith.constant 0.000000e+00 : f32
    %15 = vector.broadcast %cst_11 : f32 to vector<8x128xf32>
    %16 = arith.maximumf %14, %15 : vector<8x128xf32>
    %c0_12 = arith.constant 0 : index
    %c0_13 = arith.constant 0 : index
    %17 = vector.load %arg6[%c0_12, %c0_13] : memref<128x128xbf16, #tpu.memory_space<vmem>>, vector<128x128xbf16>
    %c0_14 = arith.constant 0 : index
    %c0_15 = arith.constant 0 : index
    %18 = vector.load %arg7[%c0_14, %c0_15] : memref<1x128xf32, #tpu.memory_space<vmem>>, vector<1x128xf32>
    %19 = arith.truncf %16 : vector<8x128xf32> to vector<8x128xbf16>
    %cst_16 = arith.constant dense<0.000000e+00> : vector<8x128xf32>
    %20 = tpu.matmul %19, %17, %cst_16 {dimension_numbers = #tpu.dot_dimension_numbers<[1], [0], [0], [1], [0, 0, 1, 1], [], []>} : vector<8x128xbf16>, vector<128x128xbf16>, vector<8x128xf32> -> vector<8x128xf32>
    %21 = vector.broadcast %18 : vector<1x128xf32> to vector<8x128xf32>
    %22 = arith.addf %20, %21 : vector<8x128xf32>
    %23 = vector.extract_strided_slice %22 {offsets = [0, 0], sizes = [8, 1], strides = [1, 1]} : vector<8x128xf32> to vector<8x1xf32>
    %c0_17 = arith.constant 0 : index
    %c0_18 = arith.constant 0 : index
    %24 = vector.load %arg8[%c0_17, %c0_18] : memref<8x1xf32, #tpu.memory_space<vmem>>, vector<8x1xf32>
    tpu.vector_store %arg8[%c0_17, %c0_18], %23 {strides = array<i32>} : memref<8x1xf32, #tpu.memory_space<vmem>>, vector<8x1xf32>,
    return
  }
  func.func @transform_0(%arg0: i32) -> (i32, i32) {
    %c0_i32 = arith.constant 0 : i32
    %c0_i32_0 = arith.constant 0 : i32
    return %arg0, %c0_i32 : i32, i32
  }
  func.func @transform_1(%arg0: i32) -> (i32, i32) {
    %c0_i32 = arith.constant 0 : i32
    %c0_i32_0 = arith.constant 0 : i32
    %c0_i32_1 = arith.constant 0 : i32
    return %c0_i32, %c0_i32_0 : i32, i32
  }
  func.func @transform_2(%arg0: i32) -> (i32, i32) {
    %c0_i32 = arith.constant 0 : i32
    %c0_i32_0 = arith.constant 0 : i32
    %c0_i32_1 = arith.constant 0 : i32
    return %c0_i32, %c0_i32_0 : i32, i32
  }
  func.func @transform_3(%arg0: i32) -> (i32, i32) {
    %c0_i32 = arith.constant 0 : i32
    %c0_i32_0 = arith.constant 0 : i32
    %c0_i32_1 = arith.constant 0 : i32
    return %c0_i32, %c0_i32_0 : i32, i32
  }
  func.func @transform_4(%arg0: i32) -> (i32, i32) {
    %c0_i32 = arith.constant 0 : i32
    %c0_i32_0 = arith.constant 0 : i32
    %c0_i32_1 = arith.constant 0 : i32
    return %c0_i32, %c0_i32_0 : i32, i32
  }
  func.func @transform_5(%arg0: i32) -> (i32, i32) {
    %c0_i32 = arith.constant 0 : i32
    %c0_i32_0 = arith.constant 0 : i32
    %c0_i32_1 = arith.constant 0 : i32
    return %c0_i32, %c0_i32_0 : i32, i32
  }
  func.func @transform_6(%arg0: i32) -> (i32, i32) {
    %c0_i32 = arith.constant 0 : i32
    %c0_i32_0 = arith.constant 0 : i32
    %c0_i32_1 = arith.constant 0 : i32
    return %c0_i32, %c0_i32_0 : i32, i32
  }
  func.func @transform_7(%arg0: i32) -> (i32, i32) {
    %c0_i32 = arith.constant 0 : i32
    %c0_i32_0 = arith.constant 0 : i32
    return %arg0, %c0_i32 : i32, i32
  }
}

</mosaic_0001>

<llo_original>
// kernel: tpu_custom_call.1
$region0: #{tpu_custom_call.1}
  #allocation0 [shape = 'u32[]', space=smem, size = 0x4, offset = 0x4, fixed_abs, tag = 'smem constant byte address 0x4 - core index']
  #allocation1 [shape = 'u32[72,128]{1,0:T(1,128)}', space=vmem, size = 0x9000, scoped, tag = 'internal scratch']
  %s0 = inlined_call_operand.hbm [shape: f32[8,32], index: 0, kind: input, shape index: {}]
  %s1 = inlined_call_operand.hbm [shape: bf16[32,128], index: 1, kind: input, shape index: {}]
  %s2 = inlined_call_operand.vmem [shape: f32[1,128], index: 2, kind: input, shape index: {}]
  %s3 = inlined_call_operand.hbm [shape: bf16[128,128], index: 3, kind: input, shape index: {}]
  %s4 = inlined_call_operand.vmem [shape: f32[1,128], index: 4, kind: input, shape index: {}]
  %s5 = inlined_call_operand.hbm [shape: bf16[128,128], index: 5, kind: input, shape index: {}]
  %s6 = inlined_call_operand.vmem [shape: f32[1,128], index: 6, kind: input, shape index: {}]
  %s7 = inlined_call_operand.vmem [shape: f32[8,1], index: 7, kind: output, shape index: {}]
  %s8 = sld [smem:[#allocation0]]
  $region54: #{tpu_custom_call.1} parent=0
    _
  %s10 = ssub.s32 1, %s8
  %s11 = scalar_select 0, %s10, %s8
  $region1: #{tpu_custom_call.1} parent=0
    #allocation2 [shape = 'u8[4096]{0}', space=vmem, size = 0x1000, scoped, tag = 'input window, operand 0, single buffered']
    #allocation3 [shape = 's32[1]{0}', space=sflag, size = 0x4, scoped, tag = 'scoped memory for tpu_custom_call.1']
    #allocation4 [shape = 'u8[8192]{0}', space=vmem, size = 0x2000, scoped, tag = 'input window, operand 1, single buffered']
    #allocation5 [shape = 's32[1]{0}', space=sflag, size = 0x4, scoped, tag = 'scoped memory for tpu_custom_call.1']
    #allocation6 [shape = 'u8[32768]{0}', space=vmem, size = 0x8000, scoped, tag = 'input window, operand 3, single buffered']
    #allocation7 [shape = 'u8[32768]{0}', space=vmem, size = 0x8000, scoped, tag = 'input window, operand 5, single buffered']
    #allocation8 [shape = 's32[1]{0}', space=sflag, size = 0x4, scoped, tag = 'scoped memory for tpu_custom_call.1']
    %12 = vsyncpa [#allocation3], 0
    %13 = vsyncpa [#allocation5], 0
    %14 = vsyncpa [#allocation8], 0
    // Predicated region
    $region2: #{tpu_custom_call.1} parent=1 // pred_check
      _
    $region3: #{tpu_custom_call.1} parent=1 // pred_check_branch
      %16 = sbr.rel (0) target = $region5
    $region4: #{tpu_custom_call.1} parent=1 // pred_region
      %18 = vsyncadd [#allocation3], 0
      %s20 = sshll.u32 %s0, 4
      %s21 = int_to_ptr.hbm [resolvable:$true] %s20
      %s22 = sshll.u32 [#allocation2], 4
      %s23 = int_to_ptr.vmem [resolvable:$true] %s22
      %25 = dma.hbm_to_vmem [thread:$0]  %s21, 128, %s23, [#allocation3]
    $region5: #{tpu_custom_call.1} parent=1 // pred_fallthru
      _
    // Predicated region
    $region6: #{tpu_custom_call.1} parent=1 // pred_check
      _
    $region7: #{tpu_custom_call.1} parent=1 // pred_check_branch
      %27 = sbr.rel (0) target = $region9
    $region8: #{tpu_custom_call.1} parent=1 // pred_region
      %29 = vsyncadd [#allocation5], 0
      %s30 = sshll.u32 %s1, 4
      %s31 = int_to_ptr.hbm [resolvable:$true] %s30
      %s32 = sshll.u32 [#allocation4], 4
      %s33 = int_to_ptr.vmem [resolvable:$true] %s32
      %38 = dma.hbm_to_vmem [thread:$0]  %s31, 256, %s33, [#allocation5], 64, 64, 4
    $region9: #{tpu_custom_call.1} parent=1 // pred_fallthru
      _
    // Predicated region
    $region10: #{tpu_custom_call.1} parent=1 // pred_check
      _
    $region11: #{tpu_custom_call.1} parent=1 // pred_check_branch
      %40 = sbr.rel (0) target = $region13
    $region12: #{tpu_custom_call.1} parent=1 // pred_region
      _
    $region13: #{tpu_custom_call.1} parent=1 // pred_fallthru
      _
    // Predicated region
    $region14: #{tpu_custom_call.1} parent=1 // pred_check
      _
    $region15: #{tpu_custom_call.1} parent=1 // pred_check_branch
      %42 = sbr.rel (0) target = $region17
    $region16: #{tpu_custom_call.1} parent=1 // pred_region
      %44 = vsyncadd [#allocation5], 0
      %s45 = sshll.u32 %s3, 4
      %s46 = int_to_ptr.hbm [resolvable:$true] %s45
      %s47 = sshll.u32 [#allocation6], 4
      %s48 = int_to_ptr.vmem [resolvable:$true] %s47
      %53 = dma.hbm_to_vmem [thread:$0]  %s46, 1024, %s48, [#allocation5], 64, 64, 4
    $region17: #{tpu_custom_call.1} parent=1 // pred_fallthru
      _
    // Predicated region
    $region18: #{tpu_custom_call.1} parent=1 // pred_check
      _
    $region19: #{tpu_custom_call.1} parent=1 // pred_check_branch
      %55 = sbr.rel (0) target = $region21
    $region20: #{tpu_custom_call.1} parent=1 // pred_region
      _
    $region21: #{tpu_custom_call.1} parent=1 // pred_fallthru
      _
    // Predicated region
    $region22: #{tpu_custom_call.1} parent=1 // pred_check
      _
    $region23: #{tpu_custom_call.1} parent=1 // pred_check_branch
      %57 = sbr.rel (0) target = $region25
    $region24: #{tpu_custom_call.1} parent=1 // pred_region
      %59 = vsyncadd [#allocation8], 0
      %s60 = sshll.u32 %s5, 4
      %s61 = int_to_ptr.hbm [resolvable:$true] %s60
      %s62 = sshll.u32 [#allocation7], 4
      %s63 = int_to_ptr.vmem [resolvable:$true] %s62
      %68 = dma.hbm_to_vmem [thread:$0]  %s61, 1024, %s63, [#allocation8], 64, 64, 4
    $region25: #{tpu_custom_call.1} parent=1 // pred_fallthru
      _
    // Predicated region
    $region26: #{tpu_custom_call.1} parent=1 // pred_check
      _
    $region27: #{tpu_custom_call.1} parent=1 // pred_check_branch
      %70 = sbr.rel (0) target = $region29
    $region28: #{tpu_custom_call.1} parent=1 // pred_region
      _
    $region29: #{tpu_custom_call.1} parent=1 // pred_fallthru
      _
    // Predicated region
    $region30: #{tpu_custom_call.1} parent=1 // pred_check
      _
    $region31: #{tpu_custom_call.1} parent=1 // pred_check_branch
      %72 = sbr.rel (0) target = $region33
    $region32: #{tpu_custom_call.1} parent=1 // pred_region
      %74 = dma.done [#allocation3], 128
    $region33: #{tpu_custom_call.1} parent=1 // pred_fallthru
      _
    // Predicated region
    $region34: #{tpu_custom_call.1} parent=1 // pred_check
      _
    $region35: #{tpu_custom_call.1} parent=1 // pred_check_branch
      %76 = sbr.rel (0) target = $region37
    $region36: #{tpu_custom_call.1} parent=1 // pred_region
      %78 = dma.done [#allocation5], 256
    $region37: #{tpu_custom_call.1} parent=1 // pred_fallthru
      _
    // Predicated region
    $region38: #{tpu_custom_call.1} parent=1 // pred_check
      _
    $region39: #{tpu_custom_call.1} parent=1 // pred_check_branch
      %80 = sbr.rel (0) target = $region41
    $region40: #{tpu_custom_call.1} parent=1 // pred_region
      %82 = dma.done [#allocation5], 1024
    $region41: #{tpu_custom_call.1} parent=1 // pred_fallthru
      _
    // Predicated region
    $region42: #{tpu_custom_call.1} parent=1 // pred_check
      _
    $region43: #{tpu_custom_call.1} parent=1 // pred_check_branch
      %84 = sbr.rel (0) target = $region45
    $region44: #{tpu_custom_call.1} parent=1 // pred_region
      %86 = dma.done [#allocation8], 1024
    $region45: #{tpu_custom_call.1} parent=1 // pred_fallthru
      _
    %v88 = vld [vmem:[#allocation2] sm:$0xff]
    %v89 = vld [vmem:[#allocation4] sm:$0xf]
    %v90 = vld [vmem:[#allocation4 + $0x4] sm:$0xf]
    %v91 = vld [vmem:[#allocation4 + $0x8] sm:$0xf]
    %v92 = vld [vmem:[#allocation4 + $0xc] sm:$0xf]
    %v93 = vld [vmem:[%s2] sm:$0x1]
    %v94 = vpack.c.bf16 %v88, %v88
    %v96 = vperm.slane %v93, 0
    %v102 = vunpack.c.l.b16 %v89
    %v103 = vunpack.c.l.b16 %v90
    %v104 = vunpack.c.l.b16 %v91
    %v105 = vunpack.c.l.b16 %v92
    %v106 = vpack.c.b16 %v103, %v102
    %v107 = vpack.c.b16 %v105, %v104
    %vm110 = vcmask 261120
    %v112 = vsel %vm110, %v94, 0
    %114 = vmatpush.bf16.msra.mxu0 0
    %115 = vmatpush.bf16.msra.mxu0 0
    %116 = vmatpush.bf16.msra.mxu0 0
    %117 = vmatpush.bf16.msra.mxu0 0
    %118 = vmatpush.bf16.msra.mxu0 0
    %119 = vmatpush.bf16.msra.mxu0 0
    %120 = vmatpush.bf16.msra.mxu0 %v107
    %121 = vmatpush.bf16.msra.mxu0 %v106
    %122 = vmatmul.bf16.gmra.mxu0 %v112
    %v123 = vpop.f32.mrf.mxu0
    %v124 = vadd.f32 %v96, %v123
    %v125 = vpop.f32.mrf.mxu0
    %126 = vdwg.mxu0
    %v127 = vmax.f32 %v124, 0.0
    %v128 = vld [vmem:[#allocation6] sm:$0xf]
    %v129 = vld [vmem:[#allocation6 + $0x4] sm:$0xf]
    %v130 = vld [vmem:[#allocation6 + $0x8] sm:$0xf]
    %v131 = vld [vmem:[#allocation6 + $0xc] sm:$0xf]
    %v132 = vld [vmem:[#allocation6 + $0x10] sm:$0xf]
    %v133 = vld [vmem:[#allocation6 + $0x14] sm:$0xf]
    %v134 = vld [vmem:[#allocation6 + $0x18] sm:$0xf]
    %v135 = vld [vmem:[#allocation6 + $0x1c] sm:$0xf]
    %v136 = vld [vmem:[#allocation6 + $0x20] sm:$0xf]
    %v137 = vld [vmem:[#allocation6 + $0x24] sm:$0xf]
    %v138 = vld [vmem:[#allocation6 + $0x28] sm:$0xf]
    %v139 = vld [vmem:[#allocation6 + $0x2c] sm:$0xf]
    %v140 = vld [vmem:[#allocation6 + $0x30] sm:$0xf]
    %v141 = vld [vmem:[#allocation6 + $0x34] sm:$0xf]
    %v142 = vld [vmem:[#allocation6 + $0x38] sm:$0xf]
    %v143 = vld [vmem:[#allocation6 + $0x3c] sm:$0xf]
    %v144 = vld [vmem:[%s4] sm:$0x1]
    %v145 = vpack.c.bf16 %v127, %v127
    %v147 = vperm.slane %v144, 0
    %v165 = vunpack.c.l.b16 %v128
    %v166 = vunpack.c.l.b16 %v129
    %v167 = vunpack.c.l.b16 %v130
    %v168 = vunpack.c.l.b16 %v131
    %v169 = vunpack.c.l.b16 %v132
    %v170 = vunpack.c.l.b16 %v133
    %v171 = vunpack.c.l.b16 %v134
    %v172 = vunpack.c.l.b16 %v135
    %v173 = vunpack.c.l.b16 %v136
    %v174 = vunpack.c.l.b16 %v137
    %v175 = vunpack.c.l.b16 %v138
    %v176 = vunpack.c.l.b16 %v139
    %v177 = vunpack.c.l.b16 %v140
    %v178 = vunpack.c.l.b16 %v141
    %v179 = vunpack.c.l.b16 %v142
    %v180 = vunpack.c.l.b16 %v143
    %v181 = vpack.c.b16 %v166, %v165
    %v182 = vpack.c.b16 %v168, %v167
    %v183 = vpack.c.b16 %v170, %v169
    %v184 = vpack.c.b16 %v172, %v171
    %v185 = vpack.c.b16 %v174, %v173
    %v186 = vpack.c.b16 %v176, %v175
    %v187 = vpack.c.b16 %v178, %v177
    %v188 = vpack.c.b16 %v180, %v179
    %197 = vmatpush.bf16.msra.mxu0 %v188
    %198 = vmatpush.bf16.msra.mxu0 %v187
    %199 = vmatpush.bf16.msra.mxu0 %v186
    %200 = vmatpush.bf16.msra.mxu0 %v185
    %201 = vmatpush.bf16.msra.mxu0 %v184
    %202 = vmatpush.bf16.msra.mxu0 %v183
    %203 = vmatpush.bf16.msra.mxu0 %v182
    %204 = vmatpush.bf16.msra.mxu0 %v181
    %205 = vmatmul.bf16.gmra.mxu0 %v145
    %v206 = vpop.f32.mrf.mxu0
    %v207 = vadd.f32 %v147, %v206
    %v208 = vpop.f32.mrf.mxu0
    %209 = vdwg.mxu0
    %v210 = vmax.f32 %v207, 0.0
    %v211 = vld [vmem:[#allocation7] sm:$0xf]
    %v212 = vld [vmem:[#allocation7 + $0x4] sm:$0xf]
    %v213 = vld [vmem:[#allocation7 + $0x8] sm:$0xf]
    %v214 = vld [vmem:[#allocation7 + $0xc] sm:$0xf]
    %v215 = vld [vmem:[#allocation7 + $0x10] sm:$0xf]
    %v216 = vld [vmem:[#allocation7 + $0x14] sm:$0xf]
    %v217 = vld [vmem:[#allocation7 + $0x18] sm:$0xf]
    %v218 = vld [vmem:[#allocation7 + $0x1c] sm:$0xf]
    %v219 = vld [vmem:[#allocation7 + $0x20] sm:$0xf]
    %v220 = vld [vmem:[#allocation7 + $0x24] sm:$0xf]
    %v221 = vld [vmem:[#allocation7 + $0x28] sm:$0xf]
    %v222 = vld [vmem:[#allocation7 + $0x2c] sm:$0xf]
    %v223 = vld [vmem:[#allocation7 + $0x30] sm:$0xf]
    %v224 = vld [vmem:[#allocation7 + $0x34] sm:$0xf]
    %v225 = vld [vmem:[#allocation7 + $0x38] sm:$0xf]
    %v226 = vld [vmem:[#allocation7 + $0x3c] sm:$0xf]
    %v227 = vld [vmem:[%s6] sm:$0x1]
    %v228 = vpack.c.bf16 %v210, %v210
    %v230 = vperm.slane %v227, 0
    %v248 = vunpack.c.l.b16 %v211
    %v249 = vunpack.c.l.b16 %v212
    %v250 = vunpack.c.l.b16 %v213
    %v251 = vunpack.c.l.b16 %v214
    %v252 = vunpack.c.l.b16 %v215
    %v253 = vunpack.c.l.b16 %v216
    %v254 = vunpack.c.l.b16 %v217
    %v255 = vunpack.c.l.b16 %v218
    %v256 = vunpack.c.l.b16 %v219
    %v257 = vunpack.c.l.b16 %v220
    %v258 = vunpack.c.l.b16 %v221
    %v259 = vunpack.c.l.b16 %v222
    %v260 = vunpack.c.l.b16 %v223
    %v261 = vunpack.c.l.b16 %v224
    %v262 = vunpack.c.l.b16 %v225
    %v263 = vunpack.c.l.b16 %v226
    %v264 = vpack.c.b16 %v249, %v248
    %v265 = vpack.c.b16 %v251, %v250
    %v266 = vpack.c.b16 %v253, %v252
    %v267 = vpack.c.b16 %v255, %v254
    %v268 = vpack.c.b16 %v257, %v256
    %v269 = vpack.c.b16 %v259, %v258
    %v270 = vpack.c.b16 %v261, %v260
    %v271 = vpack.c.b16 %v263, %v262
    %280 = vmatpush.bf16.msra.mxu0 %v271
    %281 = vmatpush.bf16.msra.mxu0 %v270
    %282 = vmatpush.bf16.msra.mxu0 %v269
    %283 = vmatpush.bf16.msra.mxu0 %v268
    %284 = vmatpush.bf16.msra.mxu0 %v267
    %285 = vmatpush.bf16.msra.mxu0 %v266
    %286 = vmatpush.bf16.msra.mxu0 %v265
    %287 = vmatpush.bf16.msra.mxu0 %v264
    %288 = vmatmul.bf16.gmra.mxu0 %v228
    %v289 = vpop.f32.mrf.mxu0
    %v290 = vadd.f32 %v230, %v289
    %v291 = vpop.f32.mrf.mxu0
    %292 = vdwg.mxu0
    %vm293 = vcmask 7168
    %294 = vst.msk [vmem:[%s7] sm:$0xff] %vm293, %v290
    // Predicated region
    $region46: #{tpu_custom_call.1} parent=1 // pred_check
      _
    $region47: #{tpu_custom_call.1} parent=1 // pred_check_branch
      %296 = sbr.rel (0) target = $region49
    $region48: #{tpu_custom_call.1} parent=1 // pred_region
      _
    $region49: #{tpu_custom_call.1} parent=1 // pred_fallthru
      _
    // Predicated region
    $region50: #{tpu_custom_call.1} parent=1 // pred_check
      _
    $region51: #{tpu_custom_call.1} parent=1 // pred_check_branch
      %298 = sbr.rel (0) target = $region53
    $region52: #{tpu_custom_call.1} parent=1 // pred_region
      _
    $region53: #{tpu_custom_call.1} parent=1 // pred_fallthru
      _
    %299 = vsyncpa [#allocation3], 1
    %300 = vsyncpa [#allocation5], 1
    %301 = vsyncpa [#allocation8], 1

</llo_original>
